<compile_context>
chip_gen: v5e
topology: v5e:2x2
jax: 0.10.0
libtpu: 0.0.40
codegen_flags: <defaults>
</compile_context>

<pallas_src>
import jax
import jax.numpy as jnp
from jax.experimental import pallas as pl
from jax.experimental.pallas import tpu as pltpu


def _round_up(a, m):
    return ((a + m - 1) // m) * m


def fvsbn_kernel(xf_ref, m_ref, b_ref, out_ref):
    # xf_ref : (TR, R*D)   folded input tile -- R original rows packed per lane-dense row
    # m_ref  : (R*D, 2R)   fused block-diagonal RHS: cols [:R] = w, cols [R:] = ones (bf16)
    # b_ref  : (1,)        linear bias (f32, SMEM)
    # out_ref: (TR, R)     per-original-row summed log-likelihood terms (f32)
    r = out_ref.shape[1]
    d = m_ref.shape[0] // r

    # bf16 operands keep the MXU single-pass; accumulate in f32.
    xf = xf_ref[...].astype(jnp.bfloat16)
    res = jnp.dot(xf, m_ref[...], preferred_element_type=jnp.float32)   # (TR, 2R)
    sw = res[:, :r]          # sum_d x * w   per original row
    s1 = res[:, r:]          # sum_d x       per original row

    z = sw + b_ref[0]
    # log(sigmoid(z)) in a numerically stable form.
    lm = jnp.minimum(z, 0.0) - jnp.log1p(jnp.exp(-jnp.abs(z)))
    # sum_d [x*lm + (1-x)*(1-lm)] = s1*lm + (D - s1)*(1 - lm)
    out_ref[...] = s1 * lm + (jnp.float32(d) - s1) * (1.0 - lm)
    # NOTE: on ragged last grid blocks, rows past N carry stale/garbage data; they flow
    # through exp/log1p harmlessly and are dropped by the masked writeback / [:B] slice.


def _pick_tile(n, tile_folded_rows, q):
    """Folded-row tile: multiple of q sublanes, large enough (>=512) to amortize the
    ~0.35us per-grid-step overhead, small enough that big inputs still give ~8 grid
    steps so the 'parallel' axis feeds both v7x TensorCores."""
    if n <= q:
        return n                                    # single full-extent block
    nf = (n // q) * q                               # stay <= array extent, multiple of q
    want = _round_up(pl.cdiv(n, 8), q)              # aim for ~8 grid steps
    tr = max(512, want)
    return min(tr, _round_up(tile_folded_rows, q), nf)


def _fvsbn_call(x, w, b, *, tile_folded_rows=4096):
    """Forward pass for one [B, D] batch.  Returns [B] float32."""
    B, D = x.shape
    if D > 128 or 128 % D != 0:
        # TODO(synk): D that does not divide 128 needs an unfolded (tb, D) fallback path.
        raise NotImplementedError("lane-folded kernel requires D to divide 128")

    R = 128 // D                        # original rows folded per lane-dense row
    Bf = _round_up(B, R)
    if Bf != B:                         # only ragged tails pay this small pad copy
        x = jnp.pad(x, ((0, Bf - B), (0, 0)))
    N = Bf // R
    xf = x.reshape(N, R * D)            # free row-major reshape -> lane-dense [N, 128]

    # Fused block-diagonal RHS (tiny, invariant across the grid, fetched once).
    w_col = jnp.asarray(w, jnp.float32).reshape(D, 1)
    eye_r = jnp.eye(R, dtype=jnp.float32)
    mw = jnp.kron(eye_r, w_col)                                # (R*D, R): sum x*w
    m1 = jnp.kron(eye_r, jnp.ones((D, 1), jnp.float32))        # (R*D, R): sum x
    m_comb = jnp.concatenate([mw, m1], axis=1).astype(jnp.bfloat16)   # (R*D, 2R)
    b_smem = jnp.asarray(b, jnp.float32).reshape(1)

    itemsize = jnp.dtype(x.dtype).itemsize
    q = 8 * max(1, 4 // itemsize)       # sublane granularity for x's dtype
    tr = _pick_tile(N, tile_folded_rows, q)
    grid = (pl.cdiv(N, tr),)

    in_block = tr * R * D * itemsize
    out_block = tr * R * 4
    vmem_limit = int(min(64 * 1024 * 1024,
                         max(4 * 1024 * 1024, 2 * (in_block + out_block) + (2 << 20))))

    cost = pl.CostEstimate(
        flops=int(2 * N * (R * D) * (2 * R) + 10 * Bf),
        transcendentals=int(2 * Bf),
        bytes_accessed=int(Bf * D * itemsize + Bf * 4 + (R * D) * (2 * R) * 2 + 4),
    )

    out = pl.pallas_call(
        fvsbn_kernel,
        out_shape=jax.ShapeDtypeStruct((N, R), jnp.float32),
        grid_spec=pltpu.PrefetchScalarGridSpec(
            num_scalar_prefetch=0,
            grid=grid,
            in_specs=[
                pl.BlockSpec((tr, R * D), lambda i: (i, 0)),        # folded x tile
                pl.BlockSpec((R * D, 2 * R), lambda i: (0, 0)),     # invariant fused RHS
                pl.BlockSpec(memory_space=pltpu.MemorySpace.SMEM),  # bias scalar
            ],
            out_specs=pl.BlockSpec((tr, R), lambda i: (i, 0)),
        ),
        compiler_params=pltpu.CompilerParams(
            dimension_semantics=("parallel",),
            vmem_limit_bytes=vmem_limit,
        ),
        cost_estimate=cost,
    )(xf, m_comb, b_smem)

    return out.reshape(Bf)[:B]


def fvsbn_forward(x_list, w, b, *, tile_folded_rows=4096):
    """x_list: list of [Bi, D] arrays of {0,1} values (f32 / bf16); w: [1, D]; b: [1].
    Returns [sum(Bi)] float32, matching torch.cat(*x, 0) -> sum(ll, dim=1)."""
    D = x_list[0].shape[1]
    R = 128 // D if (D <= 128 and 128 % D == 0) else 1
    # Rows are independent: chunks large enough for several grid steps get their own
    # pallas_call (skipping the big [B, D] concat); small chunks are concatenated and
    # batched into one call so per-call dispatch / grid=(1,) launches don't dominate.
    big_rows = 4 * tile_folded_rows * R
    outs, pending = [], []

    def _flush():
        if pending:
            xc = pending[0] if len(pending) == 1 else jnp.concatenate(pending, axis=0)
            outs.append(_fvsbn_call(xc, w, b, tile_folded_rows=tile_folded_rows))
            pending.clear()

    for xc in x_list:
        if xc.shape[0] >= big_rows:
            _flush()
            outs.append(_fvsbn_call(xc, w, b, tile_folded_rows=tile_folded_rows))
        else:
            pending.append(xc)
    _flush()
    return outs[0] if len(outs) == 1 else jnp.concatenate(outs, axis=0)


def reference_forward(x_list, w, b):
    """Pure-JAX reference mirroring the PyTorch module exactly (elementwise f32)."""
    x = jnp.concatenate(x_list, axis=0).astype(jnp.float32)
    z = jnp.sum(x * jnp.reshape(w, (1, -1)), axis=1, keepdims=True) + jnp.reshape(b, (1, 1))
    mu = jax.nn.sigmoid(z)                        # [B, 1]
    lm = jnp.log(mu)                              # [B, 1]
    ll = x * lm + (1.0 - x) * (1.0 - lm)          # [B, D]
    return jnp.sum(ll, axis=1)                    # [B]


if __name__ == "__main__":
    key = jax.random.PRNGKey(0)
    k_x1, k_x2, k_w, k_b = jax.random.split(key, 4)

    input_dim = 16   # D
    output_dim = 1

    # Two ragged chunks (the module concatenates a list along dim 0).
    x1 = (jax.random.uniform(k_x1, (8, input_dim)) > 0.5).astype(jnp.float32)
    x2 = (jax.random.uniform(k_x2, (12, input_dim)) > 0.5).astype(jnp.float32)
    x_list = [x1, x2]

    # Deterministic nn.Linear-style init: U(-1/sqrt(D), 1/sqrt(D))
    bound = 1.0 / (input_dim ** 0.5)
    w = jax.random.uniform(k_w, (output_dim, input_dim), minval=-bound, maxval=bound,
                           dtype=jnp.float32)
    b = jax.random.uniform(k_b, (output_dim,), minval=-bound, maxval=bound,
                           dtype=jnp.float32)

    out = fvsbn_forward(x_list, w, b)
    out = jax.block_until_ready(out)
    assert out.shape == (20,), out.shape

    # Tight check against a reference using bf16-rounded weights (isolates the only
    # intentional precision change: w cast to bf16 for the single-pass MXU dot).
    w_bf = w.astype(jnp.bfloat16).astype(jnp.float32)
    ref_bf = reference_forward(x_list, w_bf, b)
    assert jnp.allclose(out, ref_bf, atol=2e-3, rtol=2e-3), (out, ref_bf)

    # Looser check against the exact f32 reference (bf16 weight rounding ~1e-3 rel).
    ref = reference_forward(x_list, w, b)
    assert jnp.allclose(out, ref, atol=1e-2, rtol=1e-2), (out, ref)

    print("KERNEL_OK")
</pallas_src>

<mosaic_0001>
module attributes {stable_mosaic.version = 11 : i64} {
  func.func @fvsbn_kernel(%arg0: i32, %arg1: memref<3x128xf32, #tpu.memory_space<vmem>>, %arg2: memref<128x16xbf16, #tpu.memory_space<vmem>>, %arg3: memref<1xf32, #tpu.memory_space<smem>>, %arg4: memref<3x8xf32, #tpu.memory_space<vmem>>) attributes {dimension_semantics = [#tpu.dimension_semantics<parallel>], iteration_bounds = array<i64: 1>, scalar_prefetch = 0 : i64, scratch_operands = 0 : i64, tpu.core_type = #tpu.core_type<tc>, window_params = [{transform_indices = @transform_0, window_bounds = array<i64: 3, 128>}, {pipeline_mode = #tpu.pipeline_mode<synchronous>, transform_indices = @transform_1, window_bounds = array<i64: 128, 16>}, {transform_indices = @transform_2, window_bounds = array<i64: 1>}, {transform_indices = @transform_3, window_bounds = array<i64: 3, 8>}]} {
    %c0 = arith.constant 0 : index
    %c0_0 = arith.constant 0 : index
    %0 = vector.load %arg1[%c0, %c0_0] : memref<3x128xf32, #tpu.memory_space<vmem>>, vector<3x128xf32>
    %1 = arith.truncf %0 : vector<3x128xf32> to vector<3x128xbf16>
    %c0_1 = arith.constant 0 : index
    %c0_2 = arith.constant 0 : index
    %2 = vector.load %arg2[%c0_1, %c0_2] : memref<128x16xbf16, #tpu.memory_space<vmem>>, vector<128x16xbf16>
    %cst = arith.constant dense<0.000000e+00> : vector<3x16xf32>
    %3 = tpu.matmul %1, %2, %cst {dimension_numbers = #tpu.dot_dimension_numbers<[1], [0], [0], [1], [0, 0, 1, 1], [], []>} : vector<3x128xbf16>, vector<128x16xbf16>, vector<3x16xf32> -> vector<3x16xf32>
    %4 = vector.extract_strided_slice %3 {offsets = [0, 0], sizes = [3, 8], strides = [1, 1]} : vector<3x16xf32> to vector<3x8xf32>
    %5 = vector.extract_strided_slice %3 {offsets = [0, 8], sizes = [3, 8], strides = [1, 1]} : vector<3x16xf32> to vector<3x8xf32>
    %c0_3 = arith.constant 0 : index
    %6 = memref.load %arg3[%c0_3] : memref<1xf32, #tpu.memory_space<smem>>
    %7 = vector.broadcast %6 : f32 to vector<3x8xf32>
    %8 = arith.addf %4, %7 : vector<3x8xf32>
    %cst_4 = arith.constant 0.000000e+00 : f32
    %9 = vector.broadcast %cst_4 : f32 to vector<3x8xf32>
    %10 = arith.minimumf %8, %9 : vector<3x8xf32>
    %11 = math.absf %8 : vector<3x8xf32>
    %cst_5 = arith.constant 0.000000e+00 : f32
    %12 = vector.broadcast %cst_5 : f32 to vector<3x8xf32>
    %13 = arith.subf %12, %11 : vector<3x8xf32>
    %14 = math.exp %13 : vector<3x8xf32>
    %15 = math.log1p %14 : vector<3x8xf32>
    %16 = arith.subf %10, %15 : vector<3x8xf32>
    %17 = arith.mulf %5, %16 : vector<3x8xf32>
    %cst_6 = arith.constant 1.600000e+01 : f32
    %18 = vector.broadcast %cst_6 : f32 to vector<3x8xf32>
    %19 = arith.subf %18, %5 : vector<3x8xf32>
    %cst_7 = arith.constant 1.000000e+00 : f32
    %20 = vector.broadcast %cst_7 : f32 to vector<3x8xf32>
    %21 = arith.subf %20, %16 : vector<3x8xf32>
    %22 = arith.mulf %19, %21 : vector<3x8xf32>
    %23 = arith.addf %17, %22 : vector<3x8xf32>
    %c0_8 = arith.constant 0 : index
    %c0_9 = arith.constant 0 : index
    %24 = vector.load %arg4[%c0_8, %c0_9] : memref<3x8xf32, #tpu.memory_space<vmem>>, vector<3x8xf32>
    tpu.vector_store %arg4[%c0_8, %c0_9], %23 {strides = array<i32>} : memref<3x8xf32, #tpu.memory_space<vmem>>, vector<3x8xf32>,
    return
  }
  func.func @transform_0(%arg0: i32) -> (i32, i32) {
    %c0_i32 = arith.constant 0 : i32
    %c0_i32_0 = arith.constant 0 : i32
    return %arg0, %c0_i32 : i32, i32
  }
  func.func @transform_1(%arg0: i32) -> (i32, i32) {
    %c0_i32 = arith.constant 0 : i32
    %c0_i32_0 = arith.constant 0 : i32
    %c0_i32_1 = arith.constant 0 : i32
    return %c0_i32, %c0_i32_0 : i32, i32
  }
  func.func @transform_2(%arg0: i32) -> i32 {
    %c0_i32 = arith.constant 0 : i32
    %c0_i32_0 = arith.constant 0 : i32
    return %c0_i32 : i32
  }
  func.func @transform_3(%arg0: i32) -> (i32, i32) {
    %c0_i32 = arith.constant 0 : i32
    %c0_i32_0 = arith.constant 0 : i32
    return %arg0, %c0_i32 : i32, i32
  }
}

</mosaic_0001>

<llo_original>
// kernel: tpu_custom_call.1
$region0: #{tpu_custom_call.1}
  #allocation0 [shape = 'u32[]', space=smem, size = 0x4, offset = 0x4, fixed_abs, tag = 'smem constant byte address 0x4 - core index']
  #allocation1 [shape = 'u32[72,128]{1,0:T(1,128)}', space=vmem, size = 0x9000, scoped, tag = 'internal scratch']
  #allocation2 [shape = 'f32[1]{0:T(128)S(6)}', space=smem, size = 0x200, scoped, tag = 'scoped memory for tpu_custom_call.1']
  %s0 = inlined_call_operand.vmem [shape: f32[3,128], index: 0, kind: input, shape index: {}]
  %s1 = inlined_call_operand.vmem [shape: bf16[128,16], index: 1, kind: input, shape index: {}]
  %s2 = inlined_call_operand.<no memory space> [shape: f32[1], index: 2, kind: input, shape index: {}]
  %s3 = inlined_call_operand.hbm [shape: f32[3,8], index: 3, kind: output, shape index: {}]
  %s4 = sld [smem:[#allocation0]]
  $region22: #{tpu_custom_call.1} parent=0
    _
  %s6 = ssub.s32 1, %s4
  %s7 = scalar_select 0, %s6, %s4
  %8 = sst [smem:[#allocation2]] %s2
  $region1: #{tpu_custom_call.1} parent=0
    #allocation3 [shape = 'u8[2048]{0}', space=vmem, size = 0x800, scoped, tag = 'output window, operand 0, single buffered']
    #allocation4 [shape = 's32[1]{0}', space=sflag, size = 0x4, scoped, tag = 'scoped memory for tpu_custom_call.1']
    %9 = vsyncpa [#allocation4], 0
    // Predicated region
    $region2: #{tpu_custom_call.1} parent=1 // pred_check
      _
    $region3: #{tpu_custom_call.1} parent=1 // pred_check_branch
      %11 = sbr.rel (0) target = $region5
    $region4: #{tpu_custom_call.1} parent=1 // pred_region
      _
    $region5: #{tpu_custom_call.1} parent=1 // pred_fallthru
      _
    // Predicated region
    $region6: #{tpu_custom_call.1} parent=1 // pred_check
      _
    $region7: #{tpu_custom_call.1} parent=1 // pred_check_branch
      %13 = sbr.rel (0) target = $region9
    $region8: #{tpu_custom_call.1} parent=1 // pred_region
      _
    $region9: #{tpu_custom_call.1} parent=1 // pred_fallthru
      _
    // Predicated region
    $region10: #{tpu_custom_call.1} parent=1 // pred_check
      _
    $region11: #{tpu_custom_call.1} parent=1 // pred_check_branch
      %15 = sbr.rel (0) target = $region13
    $region12: #{tpu_custom_call.1} parent=1 // pred_region
      _
    $region13: #{tpu_custom_call.1} parent=1 // pred_fallthru
      _
    %v16 = vld [vmem:[%s0] sm:$0x7]
    %v17 = vpack.c.bf16 %v16, %v16
    %v18 = vld [vmem:[%s1] sm:$0xf]
    %v19 = vld [vmem:[%s1 + $0x4] sm:$0xf]
    %v20 = vld [vmem:[%s1 + $0x8] sm:$0xf]
    %v21 = vld [vmem:[%s1 + $0xc] sm:$0xf]
    %v22 = vld [vmem:[%s1 + $0x10] sm:$0xf]
    %v23 = vld [vmem:[%s1 + $0x14] sm:$0xf]
    %v24 = vld [vmem:[%s1 + $0x18] sm:$0xf]
    %v25 = vld [vmem:[%s1 + $0x1c] sm:$0xf]
    %v26 = vld [vmem:[%s1 + $0x20] sm:$0xf]
    %v27 = vld [vmem:[%s1 + $0x24] sm:$0xf]
    %v28 = vld [vmem:[%s1 + $0x28] sm:$0xf]
    %v29 = vld [vmem:[%s1 + $0x2c] sm:$0xf]
    %v30 = vld [vmem:[%s1 + $0x30] sm:$0xf]
    %v31 = vld [vmem:[%s1 + $0x34] sm:$0xf]
    %v32 = vld [vmem:[%s1 + $0x38] sm:$0xf]
    %v33 = vld [vmem:[%s1 + $0x3c] sm:$0xf]
    %v50 = vunpack.c.l.b16 %v18
    %v51 = vunpack.c.l.b16 %v19
    %v52 = vunpack.c.l.b16 %v20
    %v53 = vunpack.c.l.b16 %v21
    %v54 = vunpack.c.l.b16 %v22
    %v55 = vunpack.c.l.b16 %v23
    %v56 = vunpack.c.l.b16 %v24
    %v57 = vunpack.c.l.b16 %v25
    %v58 = vunpack.c.l.b16 %v26
    %v59 = vunpack.c.l.b16 %v27
    %v60 = vunpack.c.l.b16 %v28
    %v61 = vunpack.c.l.b16 %v29
    %v62 = vunpack.c.l.b16 %v30
    %v63 = vunpack.c.l.b16 %v31
    %v64 = vunpack.c.l.b16 %v32
    %v65 = vunpack.c.l.b16 %v33
    %v66 = vpack.c.b16 %v51, %v50
    %v67 = vpack.c.b16 %v53, %v52
    %v68 = vpack.c.b16 %v55, %v54
    %v69 = vpack.c.b16 %v57, %v56
    %v70 = vpack.c.b16 %v59, %v58
    %v71 = vpack.c.b16 %v61, %v60
    %v72 = vpack.c.b16 %v63, %v62
    %v73 = vpack.c.b16 %v65, %v64
    %82 = vmatpush.bf16.msra.mxu0 %v73
    %83 = vmatpush.bf16.msra.mxu0 %v72
    %84 = vmatpush.bf16.msra.mxu0 %v71
    %85 = vmatpush.bf16.msra.mxu0 %v70
    %86 = vmatpush.bf16.msra.mxu0 %v69
    %87 = vmatpush.bf16.msra.mxu0 %v68
    %88 = vmatpush.bf16.msra.mxu0 %v67
    %89 = vmatpush.bf16.msra.mxu0 %v66
    %90 = vmatmul.bf16.gmra.mxu0 %v17
    %v91 = vpop.f32.mrf.mxu0
    %v92 = vadd.f32 0.0, %v91
    %v93 = vpop.f32.mrf.mxu0
    %94 = vdwg.mxu0
    %s95 = sld [smem:[#allocation2]]
    %v96 = vstv %s95
    %v97 = vadd.f32 %v92, %v96
    %v98 = vmin.f32 %v97, 0.0
    %v99 = vand.u32 2147483647, %v97
    %v100 = vsub.f32 0.0, %v99
    %v101 = vmul.f32 %v100, 1.442695
    %v102 = vpow.pop %v101
    %v103 = vadd.f32 %v102, 1.0
    %v104 = vlog2.pop %v103
    %v105 = vmul.f32 %v104, 0.6931472
    %v106 = vmul.f32 -0.5, %v102
    %v107 = vadd.f32 %v106, 1.0
    %v108 = vmul.f32 %v107, %v102
    %v109 = vand.u32 2147483647, %v102
    %vm110 = vcmp.lt.f32.partialorder %v109, 0.0004427343
    %v111 = vsel %vm110, %v108, %v105
    %v112 = vsub.f32 %v98, %v111
    %114 = vrot.lane.b32.xlu0 %v112, 8
    %v115 = vpop.permute.xlu0 %114
    %v117 = vmul.f32 %v92, %v115
    %v118 = vsub.f32 16.0, %v92
    %v119 = vsub.f32 1.0, %v112
    %121 = vrot.lane.b32.xlu0 %v119, 8
    %v122 = vpop.permute.xlu0 %121
    %v124 = vmul.f32 %v118, %v122
    %v125 = vadd.f32 %v117, %v124
    %127 = vrot.lane.b32.xlu0 %v125, 120
    %v128 = vpop.permute.xlu0 %127
    %vm130 = vcmask 59392
    %131 = vst.msk [vmem:[#allocation3] sm:$0x7] %vm130, %v128
    // Predicated region
    $region14: #{tpu_custom_call.1} parent=1 // pred_check
      _
    $region15: #{tpu_custom_call.1} parent=1 // pred_check_branch
      %133 = sbr.rel (0) target = $region17
    $region16: #{tpu_custom_call.1} parent=1 // pred_region
      %135 = vsyncadd [#allocation4], 0
      %s137 = sshll.u32 [#allocation3], 4
      %s138 = int_to_ptr.vmem [resolvable:$true] %s137
      %s139 = sshll.u32 %s3, 4
      %s140 = int_to_ptr.hbm [resolvable:$true] %s139
      %142 = dma.vmem_to_hbm [thread:$0]  %s138, 64, %s140, [#allocation4]
    $region17: #{tpu_custom_call.1} parent=1 // pred_fallthru
      _
    // Predicated region
    $region18: #{tpu_custom_call.1} parent=1 // pred_check
      _
    $region19: #{tpu_custom_call.1} parent=1 // pred_check_branch
      %144 = sbr.rel (0) target = $region21
    $region20: #{tpu_custom_call.1} parent=1 // pred_region
      %146 = dma.done [#allocation4], 64
    $region21: #{tpu_custom_call.1} parent=1 // pred_fallthru
      _
    %147 = vsyncpa [#allocation4], 1

</llo_original>
